<compile_context>
chip_gen: v6e
topology: v6e:2x2x1
jax: 0.10.0
libtpu: 0.0.40
codegen_flags: <defaults>
</compile_context>

<pallas_src>
import functools

import jax
import jax.numpy as jnp
from jax.experimental import pallas as pl
from jax.experimental.pallas import tpu as pltpu

_LANE = 128


def _cdiv(a, b):
    return -(-a // b)


def _round_up(v, m):
    return _cdiv(v, m) * m


def _sublane(dtype):
    # Native sublane tile: 8 rows for 4-byte, 16 for 2-byte, 32 for 1-byte.
    return 8 * (4 // max(1, jnp.dtype(dtype).itemsize))


def _vmem_capacity_bytes():
    try:
        return int(pltpu.get_tpu_info().vmem_capacity_bytes)
    except Exception:  # not queryable: assume the smallest generation (v7x, 64 MiB)
        return 64 * 1024 * 1024


def _scale_ff_kernel(scale, approx_swish,
                     x_ref, w1_ref, b1_ref, w2_ref, b2_ref, o_ref):
    # Blocks (batch dim squeezed out):
    #   x_ref (tS, Dp) | w1_ref (Dp, Hp) | b1_ref (1, Hp) f32
    #   w2_ref (Hp, Dp) | b2_ref (1, Dp) f32 | o_ref (tS, Dp)
    x = x_ref[...].astype(w1_ref.dtype)  # MXU-native dtype (no-op if already equal)

    # fn(x): FeedForward = Swish(x @ W1 + b1) @ W2 + b2, f32 accumulation.
    h = jnp.dot(x, w1_ref[...], preferred_element_type=jnp.float32)   # (tS, Hp)
    h = h + b1_ref[...]
    if approx_swish:
        # EUP approximate reciprocal keeps the divide off the VALU slot; only
        # used on sub-f32 paths where the approximation is below dtype noise.
        sig = pl.reciprocal(1.0 + jnp.exp(-h), approx=True)
    else:
        sig = jax.nn.sigmoid(h)
    h = (h * sig).astype(w2_ref.dtype)                                 # Swish
    y = jnp.dot(h, w2_ref[...], preferred_element_type=jnp.float32)   # (tS, Dp)
    y = y + b2_ref[...]

    # Scale.forward: fn(x) * scale (fused elementwise).
    o_ref[...] = (y * scale).astype(o_ref.dtype)


def prepare_ff_params(w1, b1, w2, b2, *, matmul_dtype=None):
    """One-time parameter preprocessing: pad to lane-dense (128) multiples and
    optionally cast weights to a lower matmul dtype (e.g. bf16 on v5e)."""
    D, H = w1.shape
    Dp, Hp = _round_up(D, _LANE), _round_up(H, _LANE)
    w_dtype = jnp.dtype(matmul_dtype) if matmul_dtype is not None else w1.dtype
    w1p = jnp.pad(w1.astype(w_dtype), ((0, Dp - D), (0, Hp - H)))
    w2p = jnp.pad(w2.astype(w_dtype), ((0, Hp - H), (0, Dp - D)))
    b1p = jnp.pad(b1.astype(jnp.float32), (0, Hp - H))[None, :]        # (1, Hp)
    b2p = jnp.pad(b2.astype(jnp.float32), (0, Dp - D))[None, :]        # (1, Dp)
    return {"w1": w1p, "b1": b1p, "w2": w2p, "b2": b2p, "dim": D, "hidden": H}


def scale_feedforward(x, params, *, scale, block_s=512):
    """y = FeedForward(x) * scale in a single fused Pallas kernel."""
    B, S, D = x.shape
    assert params["dim"] == D, "params were prepared for a different model dim"
    w1p, b1p, w2p, b2p = params["w1"], params["b1"], params["w2"], params["b2"]
    Dp, Hp = w1p.shape
    w_item = jnp.dtype(w1p.dtype).itemsize
    x_item = jnp.dtype(x.dtype).itemsize
    sublane = max(_sublane(x.dtype), _sublane(w1p.dtype))

    # VMEM needed for a given sequence tile: double-buffered x/out tiles,
    # single-buffered resident weights/biases, f32 intermediates.
    def vmem_needed(ts):
        return (2 * ts * Dp * x_item            # x tiles (2 pipeline buffers)
                + 2 * ts * Dp * x_item          # out tiles (2 pipeline buffers)
                + (Dp * Hp + Hp * Dp) * w_item  # weights (single-buffered)
                + (Hp + Dp) * 4                 # biases (single-buffered, f32)
                + ts * Hp * 4 + 2 * ts * Dp * 4)  # f32 h / y intermediates

    capacity = _vmem_capacity_bytes()
    budget = int(0.85 * capacity)

    # Divisor-aware tile: minimize sequence padding, stay sublane-aligned,
    # shrink until the VMEM budget fits, and expose >= 2 parallel grid steps
    # (v7x shards the "parallel" axes across its 2 TensorCores).
    n_tiles = max(1, _cdiv(S, block_s))
    while True:
        tS = _round_up(_cdiv(S, n_tiles), sublane)
        Sp = _round_up(S, tS)
        n_s = Sp // tS
        fits = vmem_needed(tS) <= budget
        enough_parallel = (B * n_s >= 2) or (S <= sublane)
        if (fits and enough_parallel) or tS <= sublane:
            break
        n_tiles += 1

    need_pad = (Sp != S) or (Dp != D)
    xp = jnp.pad(x, ((0, 0), (0, Sp - S), (0, Dp - D))) if need_pad else x

    grid = (B, Sp // tS)
    approx_swish = w_item < 4  # approximate swish only on sub-f32 matmul paths
    kernel = functools.partial(_scale_ff_kernel, float(scale), approx_swish)

    def resident_spec(shape):
        # Constant index_map -> block never changes; single buffer saves VMEM.
        return pl.BlockSpec(shape, lambda b, s: (0, 0),
                            pipeline_mode=pl.Buffered(1))

    needed = vmem_needed(tS)
    vmem_limit = int(min(budget, max(2 * needed, 32 * 1024 * 1024)))

    cost = pl.CostEstimate(
        flops=2 * B * Sp * (Dp * Hp + Hp * Dp),
        transcendentals=B * Sp * Hp,
        bytes_accessed=(B * Sp * Dp) * (2 * x_item)
        + (Dp * Hp + Hp * Dp) * w_item
        + (Hp + Dp) * 4,
    )

    out = pl.pallas_call(
        kernel,
        out_shape=jax.ShapeDtypeStruct((B, Sp, Dp), x.dtype),
        grid_spec=pltpu.PrefetchScalarGridSpec(
            num_scalar_prefetch=0,
            grid=grid,
            in_specs=[
                # x: one (tS, Dp) sequence tile per step, batch dim squeezed.
                pl.BlockSpec((pl.Squeezed(), tS, Dp), lambda b, s: (b, s, 0)),
                resident_spec((Dp, Hp)),   # w1 (resident, single-buffered)
                resident_spec((1, Hp)),    # b1 row
                resident_spec((Hp, Dp)),   # w2 (resident, single-buffered)
                resident_spec((1, Dp)),    # b2 row
            ],
            out_specs=pl.BlockSpec((pl.Squeezed(), tS, Dp), lambda b, s: (b, s, 0)),
        ),
        compiler_params=pltpu.CompilerParams(
            dimension_semantics=("parallel", "parallel"),
            vmem_limit_bytes=vmem_limit,
        ),
        cost_estimate=cost,
    )(xp, w1p, b1p, w2p, b2p)

    return out[:, :S, :D] if need_pad else out


def _reference(x, w1, b1, w2, b2, scale):
    h = jnp.einsum("bsd,dh->bsh", x.astype(jnp.float32), w1.astype(jnp.float32)) + b1
    h = h * jax.nn.sigmoid(h)
    y = jnp.einsum("bsh,hd->bsd", h, w2.astype(jnp.float32)) + b2
    return y * scale


if __name__ == "__main__":
    B, S, D, H = 2, 8, 32, 64
    scale = 0.5

    key = jax.random.PRNGKey(0)
    kx, k1, k2, k3, k4 = jax.random.split(key, 5)

    x = jax.random.normal(kx, (B, S, D), dtype=jnp.float32)
    w1 = jax.random.normal(k1, (D, H), dtype=jnp.float32) * (1.0 / D) ** 0.5
    b1 = jax.random.normal(k2, (H,), dtype=jnp.float32) * 0.01
    w2 = jax.random.normal(k3, (H, D), dtype=jnp.float32) * (1.0 / H) ** 0.5
    b2 = jax.random.normal(k4, (D,), dtype=jnp.float32) * 0.01

    ref = _reference(x, w1, b1, w2, b2, scale)

    # f32 path: exact sigmoid, f32 matmuls with f32 accumulation.
    params = prepare_ff_params(w1, b1, w2, b2)
    out = jax.block_until_ready(scale_feedforward(x, params, scale=scale))
    assert out.shape == (B, S, D)
    assert out.dtype == x.dtype
    assert jnp.allclose(out, ref, atol=1e-5, rtol=1e-5), "f32 mismatch vs reference"

    # bf16 path: bf16 MXU inputs, f32 accumulation, EUP approximate swish.
    # Wider tolerance: h is round-tripped through bf16 between the two matmuls.
    x_bf16 = x.astype(jnp.bfloat16)
    params_bf16 = prepare_ff_params(w1, b1, w2, b2, matmul_dtype=jnp.bfloat16)
    out_bf16 = jax.block_until_ready(
        scale_feedforward(x_bf16, params_bf16, scale=scale))
    assert out_bf16.shape == (B, S, D)
    assert out_bf16.dtype == jnp.bfloat16
    assert jnp.allclose(out_bf16.astype(jnp.float32), ref, atol=5e-2, rtol=5e-2), \
        "bf16 mismatch vs reference"

    print("KERNEL_OK")
</pallas_src>

<mosaic_0001>
module attributes {stable_mosaic.version = 11 : i64} {
  func.func @_scale_ff_kernel(%arg0: i32, %arg1: i32, %arg2: memref<1x8x128xf32, #tpu.memory_space<vmem>>, %arg3: memref<128x128xf32, #tpu.memory_space<vmem>>, %arg4: memref<1x128xf32, #tpu.memory_space<vmem>>, %arg5: memref<128x128xf32, #tpu.memory_space<vmem>>, %arg6: memref<1x128xf32, #tpu.memory_space<vmem>>, %arg7: memref<1x8x128xf32, #tpu.memory_space<vmem>>) attributes {dimension_semantics = [#tpu.dimension_semantics<parallel>, #tpu.dimension_semantics<parallel>], iteration_bounds = array<i64: 2, 1>, scalar_prefetch = 0 : i64, scratch_operands = 0 : i64, tpu.core_type = #tpu.core_type<tc>, window_params = [{transform_indices = @transform_0, window_bounds = array<i64: 1, 8, 128>}, {pipeline_mode = #tpu.pipeline_mode<synchronous>, transform_indices = @transform_1, window_bounds = array<i64: 128, 128>}, {pipeline_mode = #tpu.pipeline_mode<synchronous>, transform_indices = @transform_2, window_bounds = array<i64: 1, 128>}, {pipeline_mode = #tpu.pipeline_mode<synchronous>, transform_indices = @transform_3, window_bounds = array<i64: 128, 128>}, {pipeline_mode = #tpu.pipeline_mode<synchronous>, transform_indices = @transform_4, window_bounds = array<i64: 1, 128>}, {transform_indices = @transform_5, window_bounds = array<i64: 1, 8, 128>}]} {
    %c0 = arith.constant 0 : index
    %c0_0 = arith.constant 0 : index
    %c0_1 = arith.constant 0 : index
    %0 = vector.load %arg2[%c0, %c0_0, %c0_1] : memref<1x8x128xf32, #tpu.memory_space<vmem>>, vector<1x8x128xf32>
    %1 = vector.shape_cast %0 : vector<1x8x128xf32> to vector<8x128xf32>
    %c0_2 = arith.constant 0 : index
    %c0_3 = arith.constant 0 : index
    %2 = vector.load %arg3[%c0_2, %c0_3] : memref<128x128xf32, #tpu.memory_space<vmem>>, vector<128x128xf32>
    %cst = arith.constant dense<0.000000e+00> : vector<8x128xf32>
    %3 = tpu.matmul %1, %2, %cst {dimension_numbers = #tpu.dot_dimension_numbers<[1], [0], [0], [1], [0, 0, 1, 1], [], []>} : vector<8x128xf32>, vector<128x128xf32>, vector<8x128xf32> -> vector<8x128xf32>
    %c0_4 = arith.constant 0 : index
    %c0_5 = arith.constant 0 : index
    %4 = vector.load %arg4[%c0_4, %c0_5] : memref<1x128xf32, #tpu.memory_space<vmem>>, vector<1x128xf32>
    %5 = vector.broadcast %4 : vector<1x128xf32> to vector<8x128xf32>
    %6 = arith.addf %3, %5 : vector<8x128xf32>
    %7 = arith.negf %6 : vector<8x128xf32>
    %8 = math.exp %7 : vector<8x128xf32>
    %cst_6 = arith.constant 1.000000e+00 : f32
    %9 = vector.broadcast %cst_6 : f32 to vector<8x128xf32>
    %10 = arith.addf %9, %8 : vector<8x128xf32>
    %11 = arith.divf %9, %10 : vector<8x128xf32>
    %12 = arith.mulf %6, %11 : vector<8x128xf32>
    %c0_7 = arith.constant 0 : index
    %c0_8 = arith.constant 0 : index
    %13 = vector.load %arg5[%c0_7, %c0_8] : memref<128x128xf32, #tpu.memory_space<vmem>>, vector<128x128xf32>
    %cst_9 = arith.constant dense<0.000000e+00> : vector<8x128xf32>
    %14 = tpu.matmul %12, %13, %cst_9 {dimension_numbers = #tpu.dot_dimension_numbers<[1], [0], [0], [1], [0, 0, 1, 1], [], []>} : vector<8x128xf32>, vector<128x128xf32>, vector<8x128xf32> -> vector<8x128xf32>
    %c0_10 = arith.constant 0 : index
    %c0_11 = arith.constant 0 : index
    %15 = vector.load %arg6[%c0_10, %c0_11] : memref<1x128xf32, #tpu.memory_space<vmem>>, vector<1x128xf32>
    %16 = vector.broadcast %15 : vector<1x128xf32> to vector<8x128xf32>
    %17 = arith.addf %14, %16 : vector<8x128xf32>
    %cst_12 = arith.constant 5.000000e-01 : f32
    %18 = vector.broadcast %cst_12 : f32 to vector<8x128xf32>
    %19 = arith.mulf %17, %18 : vector<8x128xf32>
    %c0_13 = arith.constant 0 : index
    %c0_14 = arith.constant 0 : index
    %c0_15 = arith.constant 0 : index
    %20 = vector.load %arg7[%c0_13, %c0_14, %c0_15] : memref<1x8x128xf32, #tpu.memory_space<vmem>>, vector<1x8x128xf32>
    %21 = vector.shape_cast %20 : vector<1x8x128xf32> to vector<8x128xf32>
    %22 = vector.shape_cast %19 : vector<8x128xf32> to vector<1x8x128xf32>
    tpu.vector_store %arg7[%c0_13, %c0_14, %c0_15], %22 {strides = array<i32>} : memref<1x8x128xf32, #tpu.memory_space<vmem>>, vector<1x8x128xf32>,
    return
  }
  func.func @transform_0(%arg0: i32, %arg1: i32) -> (i32, i32, i32) {
    %c0_i32 = arith.constant 0 : i32
    %c0_i32_0 = arith.constant 0 : i32
    return %arg0, %arg1, %c0_i32 : i32, i32, i32
  }
  func.func @transform_1(%arg0: i32, %arg1: i32) -> (i32, i32) {
    %c0_i32 = arith.constant 0 : i32
    %c0_i32_0 = arith.constant 0 : i32
    %c0_i32_1 = arith.constant 0 : i32
    return %c0_i32, %c0_i32_0 : i32, i32
  }
  func.func @transform_2(%arg0: i32, %arg1: i32) -> (i32, i32) {
    %c0_i32 = arith.constant 0 : i32
    %c0_i32_0 = arith.constant 0 : i32
    %c0_i32_1 = arith.constant 0 : i32
    return %c0_i32, %c0_i32_0 : i32, i32
  }
  func.func @transform_3(%arg0: i32, %arg1: i32) -> (i32, i32) {
    %c0_i32 = arith.constant 0 : i32
    %c0_i32_0 = arith.constant 0 : i32
    %c0_i32_1 = arith.constant 0 : i32
    return %c0_i32, %c0_i32_0 : i32, i32
  }
  func.func @transform_4(%arg0: i32, %arg1: i32) -> (i32, i32) {
    %c0_i32 = arith.constant 0 : i32
    %c0_i32_0 = arith.constant 0 : i32
    %c0_i32_1 = arith.constant 0 : i32
    return %c0_i32, %c0_i32_0 : i32, i32
  }
  func.func @transform_5(%arg0: i32, %arg1: i32) -> (i32, i32, i32) {
    %c0_i32 = arith.constant 0 : i32
    %c0_i32_0 = arith.constant 0 : i32
    return %arg0, %arg1, %c0_i32 : i32, i32, i32
  }
}

</mosaic_0001>

<llo_original>
// kernel: tpu_custom_call.1
$region0: #{tpu_custom_call.1}
  #allocation0 [shape = 'u32[]', space=smem, size = 0x4, offset = 0x4, fixed_abs, tag = 'smem constant byte address 0x4 - core index']
  #allocation1 [shape = 'u32[144,128]{1,0:T(1,128)}', space=vmem, size = 0x12000, scoped, tag = 'internal scratch']
  %s0 = inlined_call_operand.hbm [shape: f32[2,8,128], index: 0, kind: input, shape index: {}]
  %s1 = inlined_call_operand.hbm [shape: f32[128,128], index: 1, kind: input, shape index: {}]
  %s2 = inlined_call_operand.vmem [shape: f32[1,128], index: 2, kind: input, shape index: {}]
  %s3 = inlined_call_operand.hbm [shape: f32[128,128], index: 3, kind: input, shape index: {}]
  %s4 = inlined_call_operand.vmem [shape: f32[1,128], index: 4, kind: input, shape index: {}]
  %s5 = inlined_call_operand.hbm [shape: f32[2,8,128], index: 5, kind: output, shape index: {}]
  %s6 = sld [smem:[#allocation0]]
  $region65: #{tpu_custom_call.1} parent=0
    _
  %s8 = ssub.s32 1, %s6
  %s9 = scalar_select 0, %s8, %s6
  $region1: #{tpu_custom_call.1} parent=0
    #allocation2 [shape = 'u8[8192]{0}', space=vmem, size = 0x2000, scoped, tag = 'input window, operand 0']
    #allocation3 [shape = 's32[2]{0}', space=sflag, size = 0x8, scoped, tag = 'scoped memory for tpu_custom_call.1']
    #allocation4 [shape = 's32[2]{0}', space=sflag, size = 0x8, scoped, tag = 'scoped memory for tpu_custom_call.1']
    #allocation5 [shape = 'u8[65536]{0}', space=vmem, size = 0x10000, scoped, tag = 'input window, operand 1, single buffered']
    #allocation6 [shape = 's32[1]{0}', space=sflag, size = 0x4, scoped, tag = 'scoped memory for tpu_custom_call.1']
    #allocation7 [shape = 'u8[65536]{0}', space=vmem, size = 0x10000, scoped, tag = 'input window, operand 3, single buffered']
    #allocation8 [shape = 'u8[8192]{0}', space=vmem, size = 0x2000, scoped, tag = 'output window, operand 0']
    %10 = vsyncpa [#allocation3], 0
    %s11 = scalar_lea.sflag [#allocation3], 1
    %12 = vsyncpa %s11, 0
    %13 = vsyncpa [#allocation6], 0
    %14 = vsyncpa [#allocation4], 0
    %s15 = scalar_lea.sflag [#allocation4], 1
    %16 = vsyncpa %s15, 0
    loop: start=0, step=1, limit=4
    $region2: #{tpu_custom_call.1} parent=1 // loop_pre_header
      _
    $region3: #{tpu_custom_call.1} parent=1 // loop_header
      %s18 = sphi 0, %s22
      %p19 = scmp.ge.s32.totalorder %s18, 4
      %s25 = sphi 0, %s37
      %s26 = sphi 0, %s33
      %s27 = sphi 0, %s25
      %s28 = sphi 0, %s26
      %s29 = sphi 0, %s27
      %s30 = sphi 0, %s28
      %s42 = sphi 0, %s44
      %s45 = sphi 0, %s42
      %s46 = sphi 0, %s45
      %s62 = sphi 0, %s46
      %s66 = sphi 0, %s66
      %s68 = sphi 0, %s66
      %s69 = sphi 0, %s68
      %s83 = sphi 0, %s69
      %s87 = sphi 0, %s87
      %s89 = sphi 0, %s87
      %s90 = sphi 0, %s89
      %s104 = sphi 0, %s90
      %s108 = sphi 0, %s108
      %s110 = sphi 0, %s108
      %s111 = sphi 0, %s110
      %s125 = sphi 0, %s111
      %s129 = sphi 0, %s129
      %s131 = sphi 0, %s129
      %s132 = sphi 0, %s131
      %s146 = sphi 0, %s132
      %s154 = sphi 0, %s156
      %s157 = sphi 0, %s154
      %s158 = sphi 0, %s157
      %s174 = sphi 0, %s158
    $region4: #{tpu_custom_call.1} parent=1 // loop_header_branch
      %21 = sbr.rel (%p19) target = $region8
    $region5: #{tpu_custom_call.1} parent=1 // loop_body
      %s23 = ssub.s32 %s18, 1
      %s24 = ssub.s32 %s18, 2
      %s31 = sadd.s32 1, %s26
      %p32 = scmp.ge.s32.totalorder %s31, 1
      %s33 = scalar_select %p32, 0, %s31
      %s34 = sadd.s32 1, %s25
      %s35 = scalar_select %p32, %s34, %s25
      %p36 = scmp.ge.s32.totalorder %s35, 2
      %s37 = scalar_select %p36, 0, %s35
      %s38 = ssub.s32 %s25, %s37
      %s39 = ssub.s32 %s26, %s33
      %s40 = sor.u32 %s38, %s39
      %p41 = scmp.eq.s32.totalorder %s40, 0
      %s43 = sadd.s32 %s42, 1
      %s44 = scalar_select %p41, %s42, %s43
      %p47 = pneg %p41
      %p48 = scmp.eq.s32.totalorder %s18, 1
      %p49 = por %p47, %p48
      %p50 = scmp.ne.s32.totalorder %s42, %s45
      %p51 = scmp.eq.s32.totalorder %s18, 0
      %p52 = por %p50, %p51
      %p53 = scmp.ne.s32.totalorder %s42, %s45
      %p54 = scmp.eq.s32.totalorder %s23, 1
      %p55 = por %p53, %p54
      %p56 = scmp.ne.s32.totalorder %s45, %s46
      %p57 = scmp.eq.s32.totalorder %s23, 0
      %p58 = por %p56, %p57
      %p59 = scmp.ne.s32.totalorder %s45, %s46
      %p60 = scmp.eq.s32.totalorder %s24, 1
      %p61 = por %p59, %p60
      %p63 = scmp.ne.s32.totalorder %s46, %s62
      %p64 = scmp.eq.s32.totalorder %s24, 0
      %p65 = por %p63, %p64
      %s67 = sadd.s32 %s66, 1
      %p70 = scmp.eq.s32.totalorder %s18, 1
      %p71 = scmp.ne.s32.totalorder %s66, %s68
      %p72 = scmp.eq.s32.totalorder %s18, 0
      %p73 = por %p71, %p72
      %p74 = scmp.ne.s32.totalorder %s66, %s68
      %p75 = scmp.eq.s32.totalorder %s23, 1
      %p76 = por %p74, %p75
      %p77 = scmp.ne.s32.totalorder %s68, %s69
      %p78 = scmp.eq.s32.totalorder %s23, 0
      %p79 = por %p77, %p78
      %p80 = scmp.ne.s32.totalorder %s68, %s69
      %p81 = scmp.eq.s32.totalorder %s24, 1
      %p82 = por %p80, %p81
      %p84 = scmp.ne.s32.totalorder %s69, %s83
      %p85 = scmp.eq.s32.totalorder %s24, 0
      %p86 = por %p84, %p85
      %s88 = sadd.s32 %s87, 1
      %p91 = scmp.eq.s32.totalorder %s18, 1
      %p92 = scmp.ne.s32.totalorder %s87, %s89
      %p93 = scmp.eq.s32.totalorder %s18, 0
      %p94 = por %p92, %p93
      %p95 = scmp.ne.s32.totalorder %s87, %s89
      %p96 = scmp.eq.s32.totalorder %s23, 1
      %p97 = por %p95, %p96
      %p98 = scmp.ne.s32.totalorder %s89, %s90
      %p99 = scmp.eq.s32.totalorder %s23, 0
      %p100 = por %p98, %p99
      %p101 = scmp.ne.s32.totalorder %s89, %s90
      %p102 = scmp.eq.s32.totalorder %s24, 1
      %p103 = por %p101, %p102
      %p105 = scmp.ne.s32.totalorder %s90, %s104
      %p106 = scmp.eq.s32.totalorder %s24, 0
      %p107 = por %p105, %p106
      %s109 = sadd.s32 %s108, 1
      %p112 = scmp.eq.s32.totalorder %s18, 1
      %p113 = scmp.ne.s32.totalorder %s108, %s110
      %p114 = scmp.eq.s32.totalorder %s18, 0
      %p115 = por %p113, %p114
      %p116 = scmp.ne.s32.totalorder %s108, %s110
      %p117 = scmp.eq.s32.totalorder %s23, 1
      %p118 = por %p116, %p117
      %p119 = scmp.ne.s32.totalorder %s110, %s111
      %p120 = scmp.eq.s32.totalorder %s23, 0
      %p121 = por %p119, %p120
      %p122 = scmp.ne.s32.totalorder %s110, %s111
      %p123 = scmp.eq.s32.totalorder %s24, 1
      %p124 = por %p122, %p123
      %p126 = scmp.ne.s32.totalorder %s111, %s125
      %p127 = scmp.eq.s32.totalorder %s24, 0
      %p128 = por %p126, %p127
      %s130 = sadd.s32 %s129, 1
      %p133 = scmp.eq.s32.totalorder %s18, 1
      %p134 = scmp.ne.s32.totalorder %s129, %s131
      %p135 = scmp.eq.s32.totalorder %s18, 0
      %p136 = por %p134, %p135
      %p137 = scmp.ne.s32.totalorder %s129, %s131
      %p138 = scmp.eq.s32.totalorder %s23, 1
      %p139 = por %p137, %p138
      %p140 = scmp.ne.s32.totalorder %s131, %s132
      %p141 = scmp.eq.s32.totalorder %s23, 0
      %p142 = por %p140, %p141
      %p143 = scmp.ne.s32.totalorder %s131, %s132
      %p144 = scmp.eq.s32.totalorder %s24, 1
      %p145 = por %p143, %p144
      %p147 = scmp.ne.s32.totalorder %s132, %s146
      %p148 = scmp.eq.s32.totalorder %s24, 0
      %p149 = por %p147, %p148
      %s150 = ssub.s32 %s25, %s37
      %s151 = ssub.s32 %s26, %s33
      %s152 = sor.u32 %s150, %s151
      %p153 = scmp.eq.s32.totalorder %s152, 0
      %s155 = sadd.s32 %s154, 1
      %s156 = scalar_select %p153, %s154, %s155
      %p159 = pneg %p153
      %p160 = scmp.eq.s32.totalorder %s18, 1
      %p161 = por %p159, %p160
      %p162 = scmp.ne.s32.totalorder %s154, %s157
      %p163 = scmp.eq.s32.totalorder %s18, 0
      %p164 = por %p162, %p163
      %p165 = scmp.ne.s32.totalorder %s154, %s157
      %p166 = scmp.eq.s32.totalorder %s23, 1
      %p167 = por %p165, %p166
      %p168 = scmp.ne.s32.totalorder %s157, %s158
      %p169 = scmp.eq.s32.totalorder %s23, 0
      %p170 = por %p168, %p169
      %p171 = scmp.ne.s32.totalorder %s157, %s158
      %p172 = scmp.eq.s32.totalorder %s24, 1
      %p173 = por %p171, %p172
      %p175 = scmp.ne.s32.totalorder %s158, %s174
      %p176 = scmp.eq.s32.totalorder %s24, 0
      %p177 = por %p175, %p176
      %p178 = scmp.le.s32.totalorder 1, %s18
      %p179 = scmp.lt.s32.totalorder %s18, 3
      %p180 = pnand %p178, %p179
      %p181 = pneg %p180
      // Predicated region
      $region9: #{tpu_custom_call.1} parent=5 // pred_check
        _
      $region10: #{tpu_custom_call.1} parent=5 // pred_check_branch
        %183 = sbr.rel (%p180) target = $region12
      $region11: #{tpu_custom_call.1} parent=5 // pred_region
        %s184 = ssub.s32 %s18, 1
        // Predicated region
        $region13: #{tpu_custom_call.1} parent=11 // pred_check
          %p185 = pneg %p79
        $region14: #{tpu_custom_call.1} parent=11 // pred_check_branch
          %187 = sbr.rel (%p185) target = $region16
        $region15: #{tpu_custom_call.1} parent=11 // pred_region
          %s189 = ssub.s32 2048, 2048
          %190 = vsyncadd [#allocation6], %s189
          %s191 = sshll.u32 [#allocation5], 4
          %s192 = int_to_ptr.vmem [resolvable:$true] %s191
          %197 = dma.hbm_to_vmem [thread:$0]  %s1, 2048, %s192, [#allocation6], 128, 128, 8
        $region16: #{tpu_custom_call.1} parent=11 // pred_fallthru
          _
        // Predicated region
        $region17: #{tpu_custom_call.1} parent=11 // pred_check
          %p198 = pneg %p100
        $region18: #{tpu_custom_call.1} parent=11 // pred_check_branch
          %200 = sbr.rel (%p198) target = $region20
        $region19: #{tpu_custom_call.1} parent=11 // pred_region
          _
        $region20: #{tpu_custom_call.1} parent=11 // pred_fallthru
          _
        // Predicated region
        $region21: #{tpu_custom_call.1} parent=11 // pred_check
          %p201 = pneg %p121
        $region22: #{tpu_custom_call.1} parent=11 // pred_check_branch
          %203 = sbr.rel (%p201) target = $region24
        $region23: #{tpu_custom_call.1} parent=11 // pred_region
          %s205 = ssub.s32 2048, 2048
          %206 = vsyncadd [#allocation6], %s205
          %s207 = sshll.u32 [#allocation7], 4
          %s208 = int_to_ptr.vmem [resolvable:$true] %s207
          %213 = dma.hbm_to_vmem [thread:$0]  %s3, 2048, %s208, [#allocation6], 128, 128, 8
        $region24: #{tpu_custom_call.1} parent=11 // pred_fallthru
          _
        // Predicated region
        $region25: #{tpu_custom_call.1} parent=11 // pred_check
          %p214 = pneg %p142
        $region26: #{tpu_custom_call.1} parent=11 // pred_check_branch
          %216 = sbr.rel (%p214) target = $region28
        $region27: #{tpu_custom_call.1} parent=11 // pred_region
          _
        $region28: #{tpu_custom_call.1} parent=11 // pred_fallthru
          _
      $region12: #{tpu_custom_call.1} parent=5 // pred_fallthru
        _
      %p217 = scmp.lt.s32.totalorder %s18, 2
      // Predicated region
      $region29: #{tpu_custom_call.1} parent=5 // pred_check
        %p218 = pneg %p217
      $region30: #{tpu_custom_call.1} parent=5 // pred_check_branch
        %220 = sbr.rel (%p218) target = $region32
      $region31: #{tpu_custom_call.1} parent=5 // pred_region
        // Predicated region
        $region33: #{tpu_custom_call.1} parent=31 // pred_check
          %p221 = pneg %p52
        $region34: #{tpu_custom_call.1} parent=31 // pred_check_branch
          %223 = sbr.rel (%p221) target = $region36
        $region35: #{tpu_custom_call.1} parent=31 // pred_region
          %s224 = sand.u32 %s42, 1
          %s225 = scalar_lea.sflag [#allocation3], %s224
          %s226 = sand.u32 %s42, 1
          %s227 = smul.addr %s226, 8
          %s228 = scalar_lea.vmem [#allocation2], %s227
          %s230 = ssub.s32 128, 128
          %231 = vsyncadd %s225, %s230
          %s232 = sadd.s32 %s26, %s25
          %s233 = smul.addr %s232, 128
          %s234 = scalar_lea.hbm %s0, %s233
          %s236 = sshll.u32 %s228, 4
          %s237 = int_to_ptr.vmem [resolvable:$true] %s236
          %239 = dma.hbm_to_vmem [thread:$0]  %s234, 128, %s237, %s225
        $region36: #{tpu_custom_call.1} parent=31 // pred_fallthru
          _
      $region32: #{tpu_custom_call.1} parent=5 // pred_fallthru
        _
      %p240 = scmp.le.s32.totalorder 1, %s18
      %p241 = scmp.lt.s32.totalorder %s18, 3
      %p242 = pnand %p240, %p241
      %p243 = pneg %p242
      // Predicated region
      $region37: #{tpu_custom_call.1} parent=5 // pred_check
        _
      $region38: #{tpu_custom_call.1} parent=5 // pred_check_branch
        %245 = sbr.rel (%p242) target = $region40
      $region39: #{tpu_custom_call.1} parent=5 // pred_region
        %s246 = ssub.s32 %s18, 1
        %s247 = sand.u32 %s45, 1
        %s248 = scalar_lea.sflag [#allocation3], %s247
        %s249 = sand.u32 %s45, 1
        %s250 = smul.addr %s249, 8
        %s251 = scalar_lea.vmem [#allocation2], %s250
        // Predicated region
        $region41: #{tpu_custom_call.1} parent=39 // pred_check
          %p252 = pneg %p58
        $region42: #{tpu_custom_call.1} parent=39 // pred_check_branch
          %254 = sbr.rel (%p252) target = $region44
        $region43: #{tpu_custom_call.1} parent=39 // pred_region
          %255 = dma.done %s248, 128
        $region44: #{tpu_custom_call.1} parent=39 // pred_fallthru
          _
        // Predicated region
        $region45: #{tpu_custom_call.1} parent=39 // pred_check
          %p256 = pneg %p79
        $region46: #{tpu_custom_call.1} parent=39 // pred_check_branch
          %258 = sbr.rel (%p256) target = $region48
        $region47: #{tpu_custom_call.1} parent=39 // pred_region
          %259 = dma.done [#allocation6], 2048
        $region48: #{tpu_custom_call.1} parent=39 // pred_fallthru
          _
        // Predicated region
        $region49: #{tpu_custom_call.1} parent=39 // pred_check
          %p260 = pneg %p121
        $region50: #{tpu_custom_call.1} parent=39 // pred_check_branch
          %262 = sbr.rel (%p260) target = $region52
        $region51: #{tpu_custom_call.1} parent=39 // pred_region
          %263 = dma.done [#allocation6], 2048
        $region52: #{tpu_custom_call.1} parent=39 // pred_fallthru
          _
        %s264 = sand.u32 %s45, 1
        %s265 = scalar_lea.sflag [#allocation3], %s264
        %s266 = sand.u32 %s45, 1
        %s267 = smul.addr %s266, 8
        %s268 = scalar_lea.vmem [#allocation2], %s267
        %p269 = pneg %p58
        %p270 = pneg %p55
        %p271 = pneg %p79
        %p272 = pneg %p76
        %p273 = pneg %p100
        %p274 = pneg %p97
        %p275 = pneg %p121
        %p276 = pneg %p118
        %p277 = pneg %p142
        %p278 = pneg %p139
        %p279 = pneg %p170
        %p280 = pneg %p167
        %s281 = sand.u32 %s157, 1
        %s282 = scalar_lea.sflag [#allocation4], %s281
        %s283 = sand.u32 %s157, 1
        %s284 = smul.addr %s283, 8
        %s285 = scalar_lea.vmem [#allocation8], %s284
        %v286 = vld [vmem:[%s251] sm:$0xff]
        %v287 = vld [vmem:[#allocation5] sm:$0xff]
        %v288 = vld [vmem:[#allocation5 + $0x8] sm:$0xff]
        %v289 = vld [vmem:[#allocation5 + $0x10] sm:$0xff]
        %v290 = vld [vmem:[#allocation5 + $0x18] sm:$0xff]
        %v291 = vld [vmem:[#allocation5 + $0x20] sm:$0xff]
        %v292 = vld [vmem:[#allocation5 + $0x28] sm:$0xff]
        %v293 = vld [vmem:[#allocation5 + $0x30] sm:$0xff]
        %v294 = vld [vmem:[#allocation5 + $0x38] sm:$0xff]
        %v295 = vld [vmem:[#allocation5 + $0x40] sm:$0xff]
        %v296 = vld [vmem:[#allocation5 + $0x48] sm:$0xff]
        %v297 = vld [vmem:[#allocation5 + $0x50] sm:$0xff]
        %v298 = vld [vmem:[#allocation5 + $0x58] sm:$0xff]
        %v299 = vld [vmem:[#allocation5 + $0x60] sm:$0xff]
        %v300 = vld [vmem:[#allocation5 + $0x68] sm:$0xff]
        %v301 = vld [vmem:[#allocation5 + $0x70] sm:$0xff]
        %v302 = vld [vmem:[#allocation5 + $0x78] sm:$0xff]
        %v303 = vld [vmem:[%s2] sm:$0x1]
        %v305 = vlaneseq
        %v306 = vshrl.u32 %v305, 7
        %v307 = vsub.s32 0, %v306
        %v308 = vrot.slane %v303, %v307
        %310 = vmatprep.subr.mxu0 0.0
        %311 = vmatpush1.msra.mxu0 %v302
        %312 = vmatprep.subr.mxu0 0.0
        %313 = vmatpush1.msra.mxu0 %v301
        %314 = vmatprep.subr.mxu0 0.0
        %315 = vmatpush1.msra.mxu0 %v300
        %316 = vmatprep.subr.mxu0 0.0
        %317 = vmatpush1.msra.mxu0 %v299
        %318 = vmatprep.subr.mxu0 0.0
        %319 = vmatpush1.msra.mxu0 %v298
        %320 = vmatprep.subr.mxu0 0.0
        %321 = vmatpush1.msra.mxu0 %v297
        %322 = vmatprep.subr.mxu0 0.0
        %323 = vmatpush1.msra.mxu0 %v296
        %324 = vmatprep.subr.mxu0 0.0
        %325 = vmatpush1.msra.mxu0 %v295
        %326 = vmatprep.subr.mxu0 0.0
        %327 = vmatpush1.msra.mxu0 %v294
        %328 = vmatprep.subr.mxu0 0.0
        %329 = vmatpush1.msra.mxu0 %v293
        %330 = vmatprep.subr.mxu0 0.0
        %331 = vmatpush1.msra.mxu0 %v292
        %332 = vmatprep.subr.mxu0 0.0
        %333 = vmatpush1.msra.mxu0 %v291
        %334 = vmatprep.subr.mxu0 0.0
        %335 = vmatpush1.msra.mxu0 %v290
        %336 = vmatprep.subr.mxu0 0.0
        %337 = vmatpush1.msra.mxu0 %v289
        %338 = vmatprep.subr.mxu0 0.0
        %339 = vmatpush1.msra.mxu0 %v288
        %340 = vmatprep.subr.mxu0 0.0
        %341 = vmatpush1.msra.mxu0 %v287
        %342 = vmatprep.subr.mxu0 0.0
        %343 = vmatpush2.msra.mxu0 0.0
        %344 = vmatprep.subr.mxu0 0.0
        %345 = vmatpush2.msra.mxu0 0.0
        %346 = vmatprep.subr.mxu0 0.0
        %347 = vmatpush2.msra.mxu0 0.0
        %348 = vmatprep.subr.mxu0 0.0
        %349 = vmatpush2.msra.mxu0 0.0
        %350 = vmatprep.subr.mxu0 0.0
        %351 = vmatpush2.msra.mxu0 0.0
        %352 = vmatprep.subr.mxu0 0.0
        %353 = vmatpush2.msra.mxu0 0.0
        %354 = vmatprep.subr.mxu0 0.0
        %355 = vmatpush2.msra.mxu0 0.0
        %356 = vmatprep.subr.mxu0 0.0
        %357 = vmatpush2.msra.mxu0 0.0
        %358 = vmatprep.subr.mxu0 0.0
        %359 = vmatpush2.msra.mxu0 0.0
        %360 = vmatprep.subr.mxu0 0.0
        %361 = vmatpush2.msra.mxu0 0.0
        %362 = vmatprep.subr.mxu0 0.0
        %363 = vmatpush2.msra.mxu0 0.0
        %364 = vmatprep.subr.mxu0 0.0
        %365 = vmatpush2.msra.mxu0 0.0
        %366 = vmatprep.subr.mxu0 0.0
        %367 = vmatpush2.msra.mxu0 0.0
        %368 = vmatprep.subr.mxu0 0.0
        %369 = vmatpush2.msra.mxu0 0.0
        %370 = vmatprep.subr.mxu0 0.0
        %371 = vmatpush2.msra.mxu0 0.0
        %372 = vmatprep.subr.mxu0 0.0
        %373 = vmatpush2.msra.mxu0 0.0
        %374 = vmatprep.mubr.f32.mxu0 0.0
        %375 = vmatmul.mubr.f32.gmra.mxu0 %v286
        %v376 = vpop.f32.mrf.mxu0
        %v377 = vadd.f32 %v308, %v376
        %v378 = vpop.f32.mrf.mxu0
        %379 = vdwg.mxu0
        %v380 = vxor.u32 %v377, 2147483648
        %v381 = vmul.f32 %v380, 1.442695
        %v382 = vpow.pop %v381
        %v383 = vadd.f32 %v382, 1.0
        %v384 = vrcp.pop %v383
        %v385 = vmul.f32 1.0, %v384
        %v386 = vmul.f32 %v377, %v385
        %v387 = vld [vmem:[#allocation7] sm:$0xff]
        %v388 = vld [vmem:[#allocation7 + $0x8] sm:$0xff]
        %v389 = vld [vmem:[#allocation7 + $0x10] sm:$0xff]
        %v390 = vld [vmem:[#allocation7 + $0x18] sm:$0xff]
        %v391 = vld [vmem:[#allocation7 + $0x20] sm:$0xff]
        %v392 = vld [vmem:[#allocation7 + $0x28] sm:$0xff]
        %v393 = vld [vmem:[#allocation7 + $0x30] sm:$0xff]
        %v394 = vld [vmem:[#allocation7 + $0x38] sm:$0xff]
        %v395 = vld [vmem:[#allocation7 + $0x40] sm:$0xff]
        %v396 = vld [vmem:[#allocation7 + $0x48] sm:$0xff]
        %v397 = vld [vmem:[#allocation7 + $0x50] sm:$0xff]
        %v398 = vld [vmem:[#allocation7 + $0x58] sm:$0xff]
        %v399 = vld [vmem:[#allocation7 + $0x60] sm:$0xff]
        %v400 = vld [vmem:[#allocation7 + $0x68] sm:$0xff]
        %v401 = vld [vmem:[#allocation7 + $0x70] sm:$0xff]
        %v402 = vld [vmem:[#allocation7 + $0x78] sm:$0xff]
        %v403 = vld [vmem:[%s4] sm:$0x1]
        %v405 = vlaneseq
        %v406 = vshrl.u32 %v405, 7
        %v407 = vsub.s32 0, %v406
        %v408 = vrot.slane %v403, %v407
        %410 = vmatprep.subr.mxu0 0.0
        %411 = vmatpush1.msra.mxu0 %v402
        %412 = vmatprep.subr.mxu0 0.0
        %413 = vmatpush1.msra.mxu0 %v401
        %414 = vmatprep.subr.mxu0 0.0
        %415 = vmatpush1.msra.mxu0 %v400
        %416 = vmatprep.subr.mxu0 0.0
        %417 = vmatpush1.msra.mxu0 %v399
        %418 = vmatprep.subr.mxu0 0.0
        %419 = vmatpush1.msra.mxu0 %v398
        %420 = vmatprep.subr.mxu0 0.0
        %421 = vmatpush1.msra.mxu0 %v397
        %422 = vmatprep.subr.mxu0 0.0
        %423 = vmatpush1.msra.mxu0 %v396
        %424 = vmatprep.subr.mxu0 0.0
        %425 = vmatpush1.msra.mxu0 %v395
        %426 = vmatprep.subr.mxu0 0.0
        %427 = vmatpush1.msra.mxu0 %v394
        %428 = vmatprep.subr.mxu0 0.0
        %429 = vmatpush1.msra.mxu0 %v393
        %430 = vmatprep.subr.mxu0 0.0
        %431 = vmatpush1.msra.mxu0 %v392
        %432 = vmatprep.subr.mxu0 0.0
        %433 = vmatpush1.msra.mxu0 %v391
        %434 = vmatprep.subr.mxu0 0.0
        %435 = vmatpush1.msra.mxu0 %v390
        %436 = vmatprep.subr.mxu0 0.0
        %437 = vmatpush1.msra.mxu0 %v389
        %438 = vmatprep.subr.mxu0 0.0
        %439 = vmatpush1.msra.mxu0 %v388
        %440 = vmatprep.subr.mxu0 0.0
        %441 = vmatpush1.msra.mxu0 %v387
        %442 = vmatprep.subr.mxu0 0.0
        %443 = vmatpush2.msra.mxu0 0.0
        %444 = vmatprep.subr.mxu0 0.0
        %445 = vmatpush2.msra.mxu0 0.0
        %446 = vmatprep.subr.mxu0 0.0
        %447 = vmatpush2.msra.mxu0 0.0
        %448 = vmatprep.subr.mxu0 0.0
        %449 = vmatpush2.msra.mxu0 0.0
        %450 = vmatprep.subr.mxu0 0.0
        %451 = vmatpush2.msra.mxu0 0.0
        %452 = vmatprep.subr.mxu0 0.0
        %453 = vmatpush2.msra.mxu0 0.0
        %454 = vmatprep.subr.mxu0 0.0
        %455 = vmatpush2.msra.mxu0 0.0
        %456 = vmatprep.subr.mxu0 0.0
        %457 = vmatpush2.msra.mxu0 0.0
        %458 = vmatprep.subr.mxu0 0.0
        %459 = vmatpush2.msra.mxu0 0.0
        %460 = vmatprep.subr.mxu0 0.0
        %461 = vmatpush2.msra.mxu0 0.0
        %462 = vmatprep.subr.mxu0 0.0
        %463 = vmatpush2.msra.mxu0 0.0
        %464 = vmatprep.subr.mxu0 0.0
        %465 = vmatpush2.msra.mxu0 0.0
        %466 = vmatprep.subr.mxu0 0.0
        %467 = vmatpush2.msra.mxu0 0.0
        %468 = vmatprep.subr.mxu0 0.0
        %469 = vmatpush2.msra.mxu0 0.0
        %470 = vmatprep.subr.mxu0 0.0
        %471 = vmatpush2.msra.mxu0 0.0
        %472 = vmatprep.subr.mxu0 0.0
        %473 = vmatpush2.msra.mxu0 0.0
        %474 = vmatprep.mubr.f32.mxu0 0.0
        %475 = vmatmul.mubr.f32.gmra.mxu0 %v386
        %v476 = vpop.f32.mrf.mxu0
        %v477 = vadd.f32 %v408, %v476
        %v478 = vpop.f32.mrf.mxu0
        %479 = vdwg.mxu0
        %v480 = vmul.f32 %v477, 0.5
        %481 = vst [vmem:[%s285] sm:$0xff] %v480
        %s482 = sand.u32 %s157, 1
        %s483 = scalar_lea.sflag [#allocation4], %s482
        %s484 = sand.u32 %s157, 1
        %s485 = smul.addr %s484, 8
        %s486 = scalar_lea.vmem [#allocation8], %s485
        // Predicated region
        $region53: #{tpu_custom_call.1} parent=39 // pred_check
          %p487 = pneg %p167
        $region54: #{tpu_custom_call.1} parent=39 // pred_check_branch
          %489 = sbr.rel (%p487) target = $region56
        $region55: #{tpu_custom_call.1} parent=39 // pred_region
          %s491 = ssub.s32 128, 128
          %492 = vsyncadd %s483, %s491
          %s493 = sadd.s32 %s28, %s27
          %s494 = smul.addr %s493, 128
          %s495 = scalar_lea.hbm %s5, %s494
          %s497 = sshll.u32 %s486, 4
          %s498 = int_to_ptr.vmem [resolvable:$true] %s497
          %500 = dma.vmem_to_hbm [thread:$0]  %s498, 128, %s495, %s483
        $region56: #{tpu_custom_call.1} parent=39 // pred_fallthru
          _
      $region40: #{tpu_custom_call.1} parent=5 // pred_fallthru
        _
      %p501 = scmp.le.s32.totalorder 2, %s18
      // Predicated region
      $region57: #{tpu_custom_call.1} parent=5 // pred_check
        %p502 = pneg %p501
      $region58: #{tpu_custom_call.1} parent=5 // pred_check_branch
        %504 = sbr.rel (%p502) target = $region60
      $region59: #{tpu_custom_call.1} parent=5 // pred_region
        %s505 = ssub.s32 %s18, 2
        // Predicated region
        $region61: #{tpu_custom_call.1} parent=59 // pred_check
          %p506 = pneg %p173
        $region62: #{tpu_custom_call.1} parent=59 // pred_check_branch
          %508 = sbr.rel (%p506) target = $region64
        $region63: #{tpu_custom_call.1} parent=59 // pred_region
          %s509 = sand.u32 %s158, 1
          %s510 = scalar_lea.sflag [#allocation4], %s509
          %s511 = sand.u32 %s158, 1
          %s512 = smul.addr %s511, 8
          %s513 = scalar_lea.vmem [#allocation8], %s512
          %514 = dma.done %s510, 128
        $region64: #{tpu_custom_call.1} parent=59 // pred_fallthru
          _
      $region60: #{tpu_custom_call.1} parent=5 // pred_fallthru
        _
    $region6: #{tpu_custom_call.1} parent=1 // loop_footer
      %s22 = sadd.s32 1, %s18
    $region7: #{tpu_custom_call.1} parent=1 // loop_footer_branch
      %17 = sbr.rel target = $region3
    $region8: #{tpu_custom_call.1} parent=1 // loop_exit
      _
    %515 = vsyncpa [#allocation3], 1
    %s516 = scalar_lea.sflag [#allocation3], 1
    %517 = vsyncpa %s516, 1
    %518 = vsyncpa [#allocation6], 1
    %519 = vsyncpa [#allocation4], 1
    %s520 = scalar_lea.sflag [#allocation4], 1
    %521 = vsyncpa %s520, 1

</llo_original>
